<compile_context>
chip_gen: v6e
topology: v6e:2x2x1
jax: 0.10.0
libtpu: 0.0.40
codegen_flags: <defaults>
</compile_context>

<pallas_src>
import math

import jax
import jax.numpy as jnp
from jax import lax
from jax.experimental import pallas as pl
from jax.experimental.pallas import tpu as pltpu

HALF_LOG_2PI = math.log(2.0 * math.pi) / 2.0
LANES = 128
# ~2 MiB of native-dtype data per input DMA buffer (dtype-aware tile).
TARGET_TILE_BYTES = 2 * 1024 * 1024
# 3 inputs x 2 buffers x 2 MiB = 12 MiB plus f32 elementwise temporaries;
# 48 MiB leaves headroom on every chip (v5e/v6e 128 MiB, v7x 64 MiB physical).
VMEM_LIMIT_BYTES = 48 * 1024 * 1024


def _make_kernel(n_valid_rows, row_tile, steps_per_part, needs_mask):
    """Build the kernel with trace-time constants baked in."""

    def kernel(t_ref, m_ref, s_ref, out_ref, acc_ref):
        c = pl.program_id(0)          # part (TensorCore shard on v7x megacore)
        i = pl.program_id(1)          # streaming step within the part

        @pl.when(i == 0)
        def _init():
            acc_ref[...] = jnp.zeros_like(acc_ref)

        t = t_ref[...].astype(jnp.float32)
        m = m_ref[...].astype(jnp.float32)
        s = s_ref[...].astype(jnp.float32)
        diff = t - m

        def _accumulate(d, sig):
            # 0.5 is hoisted to the wrapper; divide -> exact EUP reciprocal.
            val = (d * d) * pl.reciprocal(sig, approx=False)
            # Reduce only the vreg-replication axis (cheap VPU adds), keeping
            # an (8, 128) lane-wise partial sum.  The single cross-lane
            # reduction happens in the wrapper on a tiny array.
            acc_ref[...] += jnp.sum(val.reshape(-1, 8, LANES), axis=0)

        if needs_mask:
            g = c * steps_per_part + i          # logical (unclamped) block idx
            row0 = g * row_tile

            @pl.when(row0 + row_tile > n_valid_rows)
            def _masked():
                row = row0 + lax.broadcasted_iota(
                    jnp.int32, (row_tile, LANES), 0)
                valid = row < n_valid_rows
                # Mask sigma to 1.0 before the reciprocal so out-of-bounds
                # garbage can never produce Inf/NaN; masked rows contribute 0.
                _accumulate(jnp.where(valid, diff, 0.0),
                            jnp.where(valid, s, 1.0))

            @pl.when(row0 + row_tile <= n_valid_rows)
            def _unmasked():
                _accumulate(diff, s)
        else:
            _accumulate(diff, s)

        @pl.when(i == steps_per_part - 1)
        def _finalize():
            out_ref[...] = acc_ref[...]

    return kernel


def negative_gaussian_log_likelihood(true, mu, sigma):
    """Pallas equivalent of NegativeGaussianLogLikelihood.forward -> scalar f32."""
    assert mu.shape == true.shape and sigma.shape == true.shape
    n = true.size

    t = true.reshape(-1)
    m = mu.reshape(-1)
    s = sigma.reshape(-1)

    rows = n // LANES
    aligned = rows * LANES
    tail = n - aligned

    const_term = jnp.float32(n * HALF_LOG_2PI)

    # Ragged tail (< 128 elements): tiny plain-JAX sum instead of padding
    # full HBM copies of all three inputs.
    if tail:
        tt = t[aligned:].astype(jnp.float32)
        mt = m[aligned:].astype(jnp.float32)
        st = s[aligned:].astype(jnp.float32)
        tail_sum = jnp.sum(jnp.square(tt - mt) / (2.0 * st))
    else:
        tail_sum = None

    if rows == 0:
        # Degenerate tiny input: everything fits in the tail path.
        return tail_sum + const_term

    if tail:
        t2 = t[:aligned].reshape(rows, LANES)
        m2 = m[:aligned].reshape(rows, LANES)
        s2 = s[:aligned].reshape(rows, LANES)
    else:
        t2 = t.reshape(rows, LANES)   # free bitcast reshape, no copy
        m2 = m.reshape(rows, LANES)
        s2 = s.reshape(rows, LANES)

    itemsize = true.dtype.itemsize
    # 4096 rows for f32, 8192 for bf16/f16 -> constant ~2 MiB per DMA buffer.
    max_tile = max(8, TARGET_TILE_BYTES // (LANES * itemsize))
    row_tile = min(max_tile, -(-rows // 8) * 8)        # multiple of 8

    nblocks = pl.cdiv(rows, row_tile)
    num_parts = 2 if nblocks >= 2 else 1   # shard rows across both v7x TCs
    steps = -(-nblocks // num_parts)
    # Mask needed if the grid's coverage exceeds the real row count (partial
    # last block and/or a duplicated fully-out-of-range trailing block).
    needs_mask = num_parts * steps * row_tile != rows

    kernel = _make_kernel(
        n_valid_rows=rows,
        row_tile=row_tile,
        steps_per_part=steps,
        needs_mask=needs_mask,
    )

    last_block = nblocks - 1

    def in_map(c, i):
        # Clamp so a duplicated trailing block never DMAs fully outside the
        # array; its contribution is masked to zero inside the kernel.
        return (jnp.minimum(c * steps + i, last_block), 0)

    tile_spec = pl.BlockSpec((row_tile, LANES), in_map)

    out = pl.pallas_call(
        kernel,
        out_shape=jax.ShapeDtypeStruct((num_parts * 8, LANES), jnp.float32),
        grid_spec=pltpu.PrefetchScalarGridSpec(
            num_scalar_prefetch=0,
            grid=(num_parts, steps),
            in_specs=[tile_spec, tile_spec, tile_spec],
            out_specs=pl.BlockSpec((8, LANES), lambda c, i: (c, 0)),
            scratch_shapes=[pltpu.VMEM((8, LANES), jnp.float32)],
        ),
        compiler_params=pltpu.CompilerParams(
            dimension_semantics=("parallel", "arbitrary"),
            vmem_limit_bytes=VMEM_LIMIT_BYTES,
        ),
        cost_estimate=pl.CostEstimate(
            flops=4 * aligned,
            transcendentals=aligned,
            bytes_accessed=3 * aligned * itemsize + num_parts * 8 * LANES * 4,
        ),
    )(t2, m2, s2)

    total = 0.5 * jnp.sum(out) + const_term
    if tail:
        total = total + tail_sum
    return total


def _reference(true, mu, sigma):
    t = true.astype(jnp.float32)
    m = mu.astype(jnp.float32)
    s = sigma.astype(jnp.float32)
    return jnp.sum(jnp.square(t - m) / (2.0 * s) + HALF_LOG_2PI)


def _check(shape, dtype, key):
    k1, k2, k3 = jax.random.split(key, 3)
    true = jax.random.normal(k1, shape, dtype=jnp.float32).astype(dtype)
    mu = jax.random.normal(k2, shape, dtype=jnp.float32).astype(dtype)
    sigma = (jax.nn.softplus(jax.random.normal(k3, shape, dtype=jnp.float32))
             + 0.1).astype(dtype)

    loss = negative_gaussian_log_likelihood(true, mu, sigma)
    jax.block_until_ready(loss)
    ref = _reference(true, mu, sigma)
    assert jnp.allclose(loss, ref, rtol=1e-4, atol=1e-2), (shape, dtype, loss, ref)


if __name__ == "__main__":
    key = jax.random.PRNGKey(0)
    keys = jax.random.split(key, 4)

    # DeepAR-style small case from the spec: (batch=2, channels=4, 16, 16).
    _check((2, 4, 16, 16), jnp.float32, keys[0])
    # Ragged size: exercises the plain-JAX tail path + partial (masked) block.
    _check((2, 3, 7, 11), jnp.float32, keys[1])
    # Two-part grid (both v7x TCs), masked boundary block, and one clamped
    # fully-out-of-range duplicate block (odd block count).
    _check((1200, 1100), jnp.float32, keys[2])
    # bf16 inputs streamed natively, upcast in-kernel, dtype-aware tile.
    _check((4, 64, 128), jnp.bfloat16, keys[3])

    print("KERNEL_OK")
</pallas_src>

<mosaic_0001>
module attributes {stable_mosaic.version = 11 : i64} {
  func.func @kernel(%arg0: i32, %arg1: i32, %arg2: memref<16x128xf32, #tpu.memory_space<vmem>>, %arg3: memref<16x128xf32, #tpu.memory_space<vmem>>, %arg4: memref<16x128xf32, #tpu.memory_space<vmem>>, %arg5: memref<8x128xf32, #tpu.memory_space<vmem>>, %arg6: memref<8x128xf32, #tpu.memory_space<vmem>>) attributes {dimension_semantics = [#tpu.dimension_semantics<parallel>, #tpu.dimension_semantics<arbitrary>], iteration_bounds = array<i64: 1, 1>, scalar_prefetch = 0 : i64, scratch_operands = 1 : i64, tpu.core_type = #tpu.core_type<tc>, window_params = [{transform_indices = @transform_0, window_bounds = array<i64: 16, 128>}, {transform_indices = @transform_1, window_bounds = array<i64: 16, 128>}, {transform_indices = @transform_2, window_bounds = array<i64: 16, 128>}, {transform_indices = @transform_3, window_bounds = array<i64: 8, 128>}]} {
    %c0_i32 = arith.constant 0 : i32
    %0 = arith.cmpi eq, %arg1, %c0_i32 : i32
    %1 = arith.extui %0 : i1 to i32
    %c0_i32_0 = arith.constant 0 : i32
    %2 = arith.cmpi ne, %1, %c0_i32_0 : i32
    scf.if %2 {
      %cst_12 = arith.constant 0.000000e+00 : f32
      %18 = vector.broadcast %cst_12 : f32 to vector<8x128xf32>
      %c0_13 = arith.constant 0 : index
      %c0_14 = arith.constant 0 : index
      %19 = vector.load %arg6[%c0_13, %c0_14] : memref<8x128xf32, #tpu.memory_space<vmem>>, vector<8x128xf32>
      tpu.vector_store %arg6[%c0_13, %c0_14], %18 {strides = array<i32>} : memref<8x128xf32, #tpu.memory_space<vmem>>, vector<8x128xf32>,
    } else {
    }
    %c0 = arith.constant 0 : index
    %c0_1 = arith.constant 0 : index
    %3 = vector.load %arg2[%c0, %c0_1] : memref<16x128xf32, #tpu.memory_space<vmem>>, vector<16x128xf32>
    %c0_2 = arith.constant 0 : index
    %c0_3 = arith.constant 0 : index
    %4 = vector.load %arg3[%c0_2, %c0_3] : memref<16x128xf32, #tpu.memory_space<vmem>>, vector<16x128xf32>
    %c0_4 = arith.constant 0 : index
    %c0_5 = arith.constant 0 : index
    %5 = vector.load %arg4[%c0_4, %c0_5] : memref<16x128xf32, #tpu.memory_space<vmem>>, vector<16x128xf32>
    %6 = arith.subf %3, %4 : vector<16x128xf32>
    %7 = arith.mulf %6, %6 : vector<16x128xf32>
    %8 = tpu.reciprocal %5 : vector<16x128xf32> -> vector<16x128xf32>
    %9 = arith.mulf %7, %8 : vector<16x128xf32>
    %c0_6 = arith.constant 0 : index
    %c0_7 = arith.constant 0 : index
    %10 = vector.load %arg6[%c0_6, %c0_7] : memref<8x128xf32, #tpu.memory_space<vmem>>, vector<8x128xf32>
    %11 = vector.shape_cast %9 : vector<16x128xf32> to vector<2x8x128xf32>
    %cst = arith.constant dense<0.000000e+00> : vector<8x128xf32>
    %12 = vector.multi_reduction <add>, %11, %cst [0] : vector<2x8x128xf32> to vector<8x128xf32>
    %13 = arith.addf %10, %12 : vector<8x128xf32>
    %c0_8 = arith.constant 0 : index
    %c0_9 = arith.constant 0 : index
    %14 = vector.load %arg6[%c0_8, %c0_9] : memref<8x128xf32, #tpu.memory_space<vmem>>, vector<8x128xf32>
    tpu.vector_store %arg6[%c0_8, %c0_9], %13 {strides = array<i32>} : memref<8x128xf32, #tpu.memory_space<vmem>>, vector<8x128xf32>,
    %c0_i32_10 = arith.constant 0 : i32
    %15 = arith.cmpi eq, %arg1, %c0_i32_10 : i32
    %16 = arith.extui %15 : i1 to i32
    %c0_i32_11 = arith.constant 0 : i32
    %17 = arith.cmpi ne, %16, %c0_i32_11 : i32
    scf.if %17 {
      %c0_12 = arith.constant 0 : index
      %c0_13 = arith.constant 0 : index
      %18 = vector.load %arg6[%c0_12, %c0_13] : memref<8x128xf32, #tpu.memory_space<vmem>>, vector<8x128xf32>
      %c0_14 = arith.constant 0 : index
      %c0_15 = arith.constant 0 : index
      %19 = vector.load %arg5[%c0_14, %c0_15] : memref<8x128xf32, #tpu.memory_space<vmem>>, vector<8x128xf32>
      tpu.vector_store %arg5[%c0_14, %c0_15], %18 {strides = array<i32>} : memref<8x128xf32, #tpu.memory_space<vmem>>, vector<8x128xf32>,
    } else {
    }
    return
  }
  func.func @transform_0(%arg0: i32, %arg1: i32) -> (i32, i32) {
    %c1_i32 = arith.constant 1 : i32
    %0 = arith.muli %arg0, %c1_i32 : i32
    %1 = arith.addi %0, %arg1 : i32
    %c0_i32 = arith.constant 0 : i32
    %2 = arith.minsi %1, %c0_i32 : i32
    %c0_i32_0 = arith.constant 0 : i32
    %c0_i32_1 = arith.constant 0 : i32
    return %2, %c0_i32_0 : i32, i32
  }
  func.func @transform_1(%arg0: i32, %arg1: i32) -> (i32, i32) {
    %c1_i32 = arith.constant 1 : i32
    %0 = arith.muli %arg0, %c1_i32 : i32
    %1 = arith.addi %0, %arg1 : i32
    %c0_i32 = arith.constant 0 : i32
    %2 = arith.minsi %1, %c0_i32 : i32
    %c0_i32_0 = arith.constant 0 : i32
    %c0_i32_1 = arith.constant 0 : i32
    return %2, %c0_i32_0 : i32, i32
  }
  func.func @transform_2(%arg0: i32, %arg1: i32) -> (i32, i32) {
    %c1_i32 = arith.constant 1 : i32
    %0 = arith.muli %arg0, %c1_i32 : i32
    %1 = arith.addi %0, %arg1 : i32
    %c0_i32 = arith.constant 0 : i32
    %2 = arith.minsi %1, %c0_i32 : i32
    %c0_i32_0 = arith.constant 0 : i32
    %c0_i32_1 = arith.constant 0 : i32
    return %2, %c0_i32_0 : i32, i32
  }
  func.func @transform_3(%arg0: i32, %arg1: i32) -> (i32, i32) {
    %c0_i32 = arith.constant 0 : i32
    %c0_i32_0 = arith.constant 0 : i32
    return %arg0, %c0_i32 : i32, i32
  }
}

</mosaic_0001>

<llo_original>
// kernel: tpu_custom_call.1
$region0: #{tpu_custom_call.1}
  #allocation0 [shape = 'u32[]', space=smem, size = 0x4, offset = 0x4, fixed_abs, tag = 'smem constant byte address 0x4 - core index']
  #allocation1 [shape = 'u32[144,128]{1,0:T(1,128)}', space=vmem, size = 0x12000, scoped, tag = 'internal scratch']
  #allocation2 [shape = 'f32[8,128]{1,0:T(8,128)}', space=vmem, size = 0x1000, scoped, tag = 'scratch operand']
  %s0 = inlined_call_operand.hbm [shape: f32[16,128], index: 0, kind: input, shape index: {}]
  %s1 = inlined_call_operand.hbm [shape: f32[16,128], index: 1, kind: input, shape index: {}]
  %s2 = inlined_call_operand.hbm [shape: f32[16,128], index: 2, kind: input, shape index: {}]
  %s3 = inlined_call_operand.hbm [shape: f32[8,128], index: 3, kind: output, shape index: {}]
  %s4 = sld [smem:[#allocation0]]
  $region42: #{tpu_custom_call.1} parent=0
    _
  %s6 = ssub.s32 1, %s4
  %s7 = scalar_select 0, %s6, %s4
  $region1: #{tpu_custom_call.1} parent=0
    #allocation3 [shape = 'u8[8192]{0}', space=vmem, size = 0x2000, scoped, tag = 'input window, operand 0, single buffered']
    #allocation4 [shape = 's32[1]{0}', space=sflag, size = 0x4, scoped, tag = 'scoped memory for tpu_custom_call.1']
    #allocation5 [shape = 's32[1]{0}', space=sflag, size = 0x4, scoped, tag = 'scoped memory for tpu_custom_call.1']
    #allocation6 [shape = 'u8[8192]{0}', space=vmem, size = 0x2000, scoped, tag = 'input window, operand 1, single buffered']
    #allocation7 [shape = 's32[1]{0}', space=sflag, size = 0x4, scoped, tag = 'scoped memory for tpu_custom_call.1']
    #allocation8 [shape = 'u8[8192]{0}', space=vmem, size = 0x2000, scoped, tag = 'input window, operand 2, single buffered']
    #allocation9 [shape = 'u8[4096]{0}', space=vmem, size = 0x1000, scoped, tag = 'output window, operand 0, single buffered']
    %8 = vsyncpa [#allocation4], 0
    %9 = vsyncpa [#allocation7], 0
    %10 = vsyncpa [#allocation5], 0
    // Predicated region
    $region2: #{tpu_custom_call.1} parent=1 // pred_check
      _
    $region3: #{tpu_custom_call.1} parent=1 // pred_check_branch
      %12 = sbr.rel (0) target = $region5
    $region4: #{tpu_custom_call.1} parent=1 // pred_region
      %s13 = sadd.s32 0, 0
      %p14 = scmp.lt.s32.totalorder %s13, 0
      %s15 = scalar_select %p14, %s13, 0
      %s16 = smul.u32 2, %s15
      %s18 = ssub.s32 256, 256
      %19 = vsyncadd [#allocation4], %s18
      %s20 = smul.addr %s16, 128
      %s21 = scalar_lea.hbm %s0, %s20
      %s22 = sshll.u32 [#allocation3], 4
      %s23 = int_to_ptr.vmem [resolvable:$true] %s22
      %28 = dma.hbm_to_vmem [thread:$0]  %s21, 256, %s23, [#allocation4], 128, 128, 8
    $region5: #{tpu_custom_call.1} parent=1 // pred_fallthru
      _
    // Predicated region
    $region6: #{tpu_custom_call.1} parent=1 // pred_check
      _
    $region7: #{tpu_custom_call.1} parent=1 // pred_check_branch
      %30 = sbr.rel (0) target = $region9
    $region8: #{tpu_custom_call.1} parent=1 // pred_region
      %s31 = sadd.s32 0, 0
      %p32 = scmp.lt.s32.totalorder %s31, 0
      %s33 = scalar_select %p32, %s31, 0
      %s34 = smul.u32 2, %s33
      %s36 = ssub.s32 256, 256
      %37 = vsyncadd [#allocation7], %s36
      %s38 = smul.addr %s34, 128
      %s39 = scalar_lea.hbm %s1, %s38
      %s40 = sshll.u32 [#allocation6], 4
      %s41 = int_to_ptr.vmem [resolvable:$true] %s40
      %46 = dma.hbm_to_vmem [thread:$0]  %s39, 256, %s41, [#allocation7], 128, 128, 8
    $region9: #{tpu_custom_call.1} parent=1 // pred_fallthru
      _
    // Predicated region
    $region10: #{tpu_custom_call.1} parent=1 // pred_check
      _
    $region11: #{tpu_custom_call.1} parent=1 // pred_check_branch
      %48 = sbr.rel (0) target = $region13
    $region12: #{tpu_custom_call.1} parent=1 // pred_region
      %s49 = sadd.s32 0, 0
      %p50 = scmp.lt.s32.totalorder %s49, 0
      %s51 = scalar_select %p50, %s49, 0
      %s52 = smul.u32 2, %s51
      %s54 = ssub.s32 256, 256
      %55 = vsyncadd [#allocation7], %s54
      %s56 = smul.addr %s52, 128
      %s57 = scalar_lea.hbm %s2, %s56
      %s58 = sshll.u32 [#allocation8], 4
      %s59 = int_to_ptr.vmem [resolvable:$true] %s58
      %64 = dma.hbm_to_vmem [thread:$0]  %s57, 256, %s59, [#allocation7], 128, 128, 8
    $region13: #{tpu_custom_call.1} parent=1 // pred_fallthru
      _
    // Predicated region
    $region14: #{tpu_custom_call.1} parent=1 // pred_check
      _
    $region15: #{tpu_custom_call.1} parent=1 // pred_check_branch
      %66 = sbr.rel (0) target = $region17
    $region16: #{tpu_custom_call.1} parent=1 // pred_region
      %67 = dma.done [#allocation4], 256
    $region17: #{tpu_custom_call.1} parent=1 // pred_fallthru
      _
    // Predicated region
    $region18: #{tpu_custom_call.1} parent=1 // pred_check
      _
    $region19: #{tpu_custom_call.1} parent=1 // pred_check_branch
      %69 = sbr.rel (0) target = $region21
    $region20: #{tpu_custom_call.1} parent=1 // pred_region
      %70 = dma.done [#allocation7], 256
    $region21: #{tpu_custom_call.1} parent=1 // pred_fallthru
      _
    // Predicated region
    $region22: #{tpu_custom_call.1} parent=1 // pred_check
      _
    $region23: #{tpu_custom_call.1} parent=1 // pred_check_branch
      %72 = sbr.rel (0) target = $region25
    $region24: #{tpu_custom_call.1} parent=1 // pred_region
      %73 = dma.done [#allocation7], 256
    $region25: #{tpu_custom_call.1} parent=1 // pred_fallthru
      _
    %s74 = sadd.s32 0, 0
    %p75 = scmp.lt.s32.totalorder %s74, 0
    %s76 = scalar_select %p75, %s74, 0
    %s77 = smul.u32 2, %s76
    %s78 = sadd.s32 0, 0
    %p79 = scmp.lt.s32.totalorder %s78, 0
    %s80 = scalar_select %p79, %s78, 0
    %s81 = smul.u32 2, %s80
    %s82 = sadd.s32 0, 0
    %p83 = scmp.lt.s32.totalorder %s82, 0
    %s84 = scalar_select %p83, %s82, 0
    %s85 = smul.u32 2, %s84
    %p86 = scmp.eq.s32.totalorder 0, 0
    // Predicated region
    $region26: #{tpu_custom_call.1} parent=1 // pred_check
      %p87 = pneg %p86
    $region27: #{tpu_custom_call.1} parent=1 // pred_check_branch
      %89 = sbr.rel (%p87) target = $region29
    $region28: #{tpu_custom_call.1} parent=1 // pred_region
      %90 = vst [vmem:[#allocation2] sm:$0xff] 0.0
    $region29: #{tpu_custom_call.1} parent=1 // pred_fallthru
      _
    %v91 = vld [vmem:[#allocation3] sm:$0xff]
    %v92 = vld [vmem:[#allocation3 + $0x8] sm:$0xff]
    %v93 = vld [vmem:[#allocation6] sm:$0xff]
    %v94 = vld [vmem:[#allocation6 + $0x8] sm:$0xff]
    %v95 = vld [vmem:[#allocation8] sm:$0xff]
    %v96 = vld [vmem:[#allocation8 + $0x8] sm:$0xff]
    %v97 = vsub.f32 %v91, %v93
    %v98 = vsub.f32 %v92, %v94
    %v99 = vmul.f32 %v97, %v97
    %v100 = vmul.f32 %v98, %v98
    %v101 = vrcp.pop %v95
    %v102 = vrcp.pop %v96
    %v103 = vmul.f32 %v99, %v101
    %v104 = vmul.f32 %v100, %v102
    %v105 = vld [vmem:[#allocation2] sm:$0xff]
    %v106 = vadd.f32 %v103, %v104
    %v107 = vadd.f32 %v105, %v106
    %108 = vst [vmem:[#allocation2] sm:$0xff] %v107
    // Predicated region
    $region30: #{tpu_custom_call.1} parent=1 // pred_check
      %p109 = pneg %p86
    $region31: #{tpu_custom_call.1} parent=1 // pred_check_branch
      %111 = sbr.rel (%p109) target = $region33
    $region32: #{tpu_custom_call.1} parent=1 // pred_region
      %v112 = vld [vmem:[#allocation2] sm:$0xff]
      %113 = vst [vmem:[#allocation9] sm:$0xff] %v112
    $region33: #{tpu_custom_call.1} parent=1 // pred_fallthru
      _
    // Predicated region
    $region34: #{tpu_custom_call.1} parent=1 // pred_check
      _
    $region35: #{tpu_custom_call.1} parent=1 // pred_check_branch
      %115 = sbr.rel (0) target = $region37
    $region36: #{tpu_custom_call.1} parent=1 // pred_region
      %s117 = ssub.s32 128, 128
      %118 = vsyncadd [#allocation5], %s117
      %s120 = sshll.u32 [#allocation9], 4
      %s121 = int_to_ptr.vmem [resolvable:$true] %s120
      %123 = dma.vmem_to_hbm [thread:$0]  %s121, 128, %s3, [#allocation5]
    $region37: #{tpu_custom_call.1} parent=1 // pred_fallthru
      _
    // Predicated region
    $region38: #{tpu_custom_call.1} parent=1 // pred_check
      _
    $region39: #{tpu_custom_call.1} parent=1 // pred_check_branch
      %125 = sbr.rel (0) target = $region41
    $region40: #{tpu_custom_call.1} parent=1 // pred_region
      %126 = dma.done [#allocation5], 128
    $region41: #{tpu_custom_call.1} parent=1 // pred_fallthru
      _
    %127 = vsyncpa [#allocation4], 1
    %128 = vsyncpa [#allocation7], 1
    %129 = vsyncpa [#allocation5], 1

</llo_original>
